<compile_context>
chip_gen: v7x
topology: tpu7x:2x2x1
jax: 0.10.0
libtpu: 0.0.40
codegen_flags: <defaults>
</compile_context>

<pallas_src>
import functools

import jax
import jax.numpy as jnp
from jax.experimental import pallas as pl
from jax.experimental.pallas import tpu as pltpu


def _cdiv(a, b):
    return -(-a // b)


def _round_up(a, b):
    return _cdiv(a, b) * b


def _vmem_capacity_bytes():
    """Physical VMEM per core; conservative 64 MiB fallback (v7x-safe)."""
    try:
        return int(pltpu.get_tpu_info().vmem_capacity_bytes)
    except Exception:
        return 64 * 1024 * 1024


def _choose_row_tile(rows, tm_cap):
    """Pick the row tile: multiple of 16 sublanes (covers fp32/bf16 packing),
    <= min(tm_cap, 512), never larger than the row count (so blocks never
    exceed the array), with >=4 grid steps when rows allow (keeps the
    double-buffered pipeline full) and a preference for an even step count
    (v7x: 2 TensorCores share the "parallel" grid axis)."""
    if rows < 16:
        return rows  # single block equal to the full (tiny) row extent
    tm_hi = max(16, min(tm_cap, 512, (rows // 16) * 16))
    want_steps = min(4, _cdiv(rows, 16))
    best_key, best_tm = None, 16
    for tm in range(tm_hi, 15, -16):
        steps = _cdiv(rows, tm)
        key = (
            steps >= want_steps,             # enough steps to hide DMAs
            steps == 1 or steps % 2 == 0,    # even split across 2 TCs (v7x)
            tm,                              # then: biggest tile
        )
        if best_key is None or key > best_key:
            best_key, best_tm = key, tm
    return best_tm


def _rmsnorm_kernel(x_ref, w_ref, o_ref, *, eps, inv_h, low_precision_scale):
    # x_ref: (tm, H) tile of independent rows; w_ref: (1, H) gamma
    # (constant block index -> resident in VMEM across the whole grid).
    x = x_ref[...]
    xf = x.astype(jnp.float32)
    # mean-square as sum(x^2) * (1/H); 1/H is a compile-time constant.
    ms = jnp.sum(xf * xf, axis=-1, keepdims=True) * inv_h
    inv = jax.lax.rsqrt(ms + eps)                    # 1 / RMS  (EUP)
    if low_precision_scale:
        # bf16/fp16 path: packed low-precision scale muls; only the
        # sum-of-squares reduce above is done in fp32.
        o_ref[...] = ((x * inv.astype(x.dtype)) * w_ref[...]).astype(o_ref.dtype)
    else:
        # fp32 path: full fp32 scale, matching Megatron's fused kernel.
        o_ref[...] = (xf * inv * w_ref[...]).astype(o_ref.dtype)


def mixed_fused_rms_norm(x, weight, eps=1e-6):
    """RMSNorm over the trailing `weight.ndim` dims with per-element gamma."""
    norm_ndim = weight.ndim
    assert x.shape[x.ndim - norm_ndim:] == weight.shape, (
        "trailing dims must match normalized_shape")

    h = int(weight.size)
    orig_shape = x.shape
    x2d = x.reshape(-1, h)
    rows = x2d.shape[0]

    low_precision_scale = (
        jnp.issubdtype(x.dtype, jnp.floating) and jnp.dtype(x.dtype).itemsize < 4
    )
    # gamma cast once in the wrapper: input dtype for the low-precision path,
    # fp32 otherwise (no per-tile cast inside the kernel).
    w_dtype = x.dtype if low_precision_scale else jnp.float32
    w2d = weight.reshape(1, h).astype(w_dtype)

    # ---- tile selection: biggest row tile the VMEM budget allows ----
    vmem_phys = _vmem_capacity_bytes()
    itemsize = jnp.dtype(x.dtype).itemsize
    # Conservative per-row footprint: double-buffered in + out tiles, plus
    # ~4 fp32 (tm, H) temporaries used inside the kernel body.
    per_row_bytes = 4 * h * itemsize + 4 * h * 4
    tile_budget = vmem_phys // 2
    tm_cap = max(16, (tile_budget // per_row_bytes) // 16 * 16)
    tm = int(_choose_row_tile(rows, tm_cap))

    grid = (_cdiv(rows, tm),)

    # ---- scoped VMEM limit derived from the chosen tiles (+50% headroom),
    #      capped at 3/4 of physical VMEM (48 MiB on v7x's 64 MiB parts) ----
    tile_bytes = tm * h * itemsize
    n_f32_temps = 2 if low_precision_scale else 4
    vmem_needed = (
        2 * tile_bytes                                   # double-buffered input
        + 2 * tile_bytes                                 # double-buffered output
        + 2 * h * jnp.dtype(w_dtype).itemsize            # resident gamma
        + n_f32_temps * tm * h * 4                       # fp32 temporaries
    )
    vmem_limit = int(min((vmem_phys * 3) // 4,
                         max(vmem_needed + vmem_needed // 2, 16 * 1024 * 1024)))

    # TODO(synk): for very small H (< 128, e.g. the demo H=32) the last dim is
    # not lane-dense so stores are masked; real Megatron hidden sizes (>=1024)
    # are lane-dense automatically. A transposed (H-on-sublane) layout would
    # fix small H but is not worth it for the real workload.
    out = pl.pallas_call(
        functools.partial(
            _rmsnorm_kernel,
            eps=float(eps),
            inv_h=1.0 / float(h),
            low_precision_scale=bool(low_precision_scale),
        ),
        out_shape=jax.ShapeDtypeStruct((rows, h), x.dtype),
        grid_spec=pltpu.PrefetchScalarGridSpec(
            num_scalar_prefetch=0,
            grid=grid,
            in_specs=[
                pl.BlockSpec((tm, h), lambda i: (i, 0)),   # x row tile (ragged last block OK:
                                                           # rows are independent, writes clipped)
                pl.BlockSpec((1, h), lambda i: (0, 0)),    # gamma (resident)
            ],
            out_specs=pl.BlockSpec((tm, h), lambda i: (i, 0)),
        ),
        compiler_params=pltpu.CompilerParams(
            dimension_semantics=("parallel",),   # shards row tiles across TCs on v7x
            vmem_limit_bytes=vmem_limit,
        ),
    )(x2d, w2d)

    return out.reshape(orig_shape)


def _reference_rmsnorm(x, weight, eps=1e-6):
    xf = x.astype(jnp.float32)
    ms = jnp.mean(xf * xf, axis=-1, keepdims=True)
    y = xf * jax.lax.rsqrt(ms + eps) * weight.astype(jnp.float32)
    return y.astype(x.dtype)


if __name__ == "__main__":
    key = jax.random.PRNGKey(0)
    seq, batch, hidden = 8, 2, 32

    x = jax.random.normal(key, (seq, batch, hidden), dtype=jnp.float32)
    # elementwise_affine=True -> gamma initialized to ones (init.ones_)
    weight = jnp.ones((hidden,), dtype=jnp.float32)

    y = mixed_fused_rms_norm(x, weight, eps=1e-6)
    y = jax.block_until_ready(y)

    y_ref = _reference_rmsnorm(x, weight, eps=1e-6)
    assert y.shape == x.shape and y.dtype == x.dtype
    assert jnp.max(jnp.abs(y - y_ref)) < 1e-5

    # Also exercise a row count that is not a multiple of the tile (ragged
    # last block path) and a bf16 input (low-precision scale path).
    x2 = jax.random.normal(jax.random.PRNGKey(1), (5, 3, hidden), dtype=jnp.bfloat16)
    y2 = jax.block_until_ready(mixed_fused_rms_norm(x2, weight, eps=1e-6))
    y2_ref = _reference_rmsnorm(x2, weight, eps=1e-6)
    assert y2.shape == x2.shape and y2.dtype == x2.dtype
    assert jnp.max(jnp.abs(y2.astype(jnp.float32) - y2_ref.astype(jnp.float32))) < 4e-2

    print("KERNEL_OK")
</pallas_src>

<mosaic_0001>
module attributes {stable_mosaic.version = 11 : i64} {
  func.func @_rmsnorm_kernel(%arg0: i32, %arg1: memref<16x32xf32, #tpu.memory_space<vmem>>, %arg2: memref<1x32xf32, #tpu.memory_space<vmem>>, %arg3: memref<16x32xf32, #tpu.memory_space<vmem>>) attributes {dimension_semantics = [#tpu.dimension_semantics<parallel>], iteration_bounds = array<i64: 1>, scalar_prefetch = 0 : i64, scratch_operands = 0 : i64, tpu.core_type = #tpu.core_type<tc>, window_params = [{transform_indices = @transform_0, window_bounds = array<i64: 16, 32>}, {pipeline_mode = #tpu.pipeline_mode<synchronous>, transform_indices = @transform_1, window_bounds = array<i64: 1, 32>}, {transform_indices = @transform_2, window_bounds = array<i64: 16, 32>}]} {
    %c0 = arith.constant 0 : index
    %c0_0 = arith.constant 0 : index
    %0 = vector.load %arg1[%c0, %c0_0] : memref<16x32xf32, #tpu.memory_space<vmem>>, vector<16x32xf32>
    %1 = arith.mulf %0, %0 : vector<16x32xf32>
    %cst = arith.constant dense<0.000000e+00> : vector<16xf32>
    %2 = vector.multi_reduction <add>, %1, %cst [1] : vector<16x32xf32> to vector<16xf32>
    %3 = vector.shape_cast %2 : vector<16xf32> to vector<16x1xf32>
    %cst_1 = arith.constant 3.125000e-02 : f32
    %4 = vector.broadcast %cst_1 : f32 to vector<16x1xf32>
    %5 = arith.mulf %3, %4 : vector<16x1xf32>
    %cst_2 = arith.constant 9.99999997E-7 : f32
    %6 = vector.broadcast %cst_2 : f32 to vector<16x1xf32>
    %7 = arith.addf %5, %6 : vector<16x1xf32>
    %8 = math.rsqrt %7 : vector<16x1xf32>
    %9 = vector.broadcast %8 : vector<16x1xf32> to vector<16x32xf32>
    %10 = arith.mulf %0, %9 : vector<16x32xf32>
    %c0_3 = arith.constant 0 : index
    %c0_4 = arith.constant 0 : index
    %11 = vector.load %arg2[%c0_3, %c0_4] : memref<1x32xf32, #tpu.memory_space<vmem>>, vector<1x32xf32>
    %12 = vector.broadcast %11 : vector<1x32xf32> to vector<16x32xf32>
    %13 = arith.mulf %10, %12 : vector<16x32xf32>
    %c0_5 = arith.constant 0 : index
    %c0_6 = arith.constant 0 : index
    %14 = vector.load %arg3[%c0_5, %c0_6] : memref<16x32xf32, #tpu.memory_space<vmem>>, vector<16x32xf32>
    tpu.vector_store %arg3[%c0_5, %c0_6], %13 {strides = array<i32>} : memref<16x32xf32, #tpu.memory_space<vmem>>, vector<16x32xf32>,
    return
  }
  func.func @transform_0(%arg0: i32) -> (i32, i32) {
    %c0_i32 = arith.constant 0 : i32
    %c0_i32_0 = arith.constant 0 : i32
    return %arg0, %c0_i32 : i32, i32
  }
  func.func @transform_1(%arg0: i32) -> (i32, i32) {
    %c0_i32 = arith.constant 0 : i32
    %c0_i32_0 = arith.constant 0 : i32
    %c0_i32_1 = arith.constant 0 : i32
    return %c0_i32, %c0_i32_0 : i32, i32
  }
  func.func @transform_2(%arg0: i32) -> (i32, i32) {
    %c0_i32 = arith.constant 0 : i32
    %c0_i32_0 = arith.constant 0 : i32
    return %arg0, %c0_i32 : i32, i32
  }
}

</mosaic_0001>

<llo_original>
// kernel: tpu_custom_call.1
$region0: #{tpu_custom_call.1}
  #allocation0 [shape = 'u32[]', space=smem, size = 0x4, offset = 0x4, fixed_abs, tag = 'smem constant byte address 0x4 - core index']
  #allocation1 [shape = 'u32[144,128]{1,0:T(1,128)}', space=vmem, size = 0x12000, scoped, tag = 'internal scratch']
  %s0 = inlined_call_operand.hbm [shape: f32[16,32], index: 0, kind: input, shape index: {}]
  %s1 = inlined_call_operand.vmem [shape: f32[1,32], index: 1, kind: input, shape index: {}]
  %s2 = inlined_call_operand.hbm [shape: f32[16,32], index: 2, kind: output, shape index: {}]
  %s3 = sld [smem:[#allocation0]]
  $region22: #{tpu_custom_call.1} parent=0
    _
  %s5 = ssub.s32 1, %s3
  %s6 = scalar_select 0, %s5, %s3
  $region1: #{tpu_custom_call.1} parent=0
    #allocation2 [shape = 'u8[8192]{0}', space=vmem, size = 0x2000, scoped, tag = 'input window, operand 0, single buffered']
    #allocation3 [shape = 's32[1]{0}', space=sflag, size = 0x4, scoped, tag = 'scoped memory for tpu_custom_call.1']
    #allocation4 [shape = 's32[1]{0}', space=sflag, size = 0x4, scoped, tag = 'scoped memory for tpu_custom_call.1']
    #allocation5 [shape = 'u8[8192]{0}', space=vmem, size = 0x2000, scoped, tag = 'output window, operand 0, single buffered']
    %7 = vsyncpa [#allocation3], 0
    %8 = vsyncpa [#allocation4], 0
    // Predicated region
    $region2: #{tpu_custom_call.1} parent=1 // pred_check
      _
    $region3: #{tpu_custom_call.1} parent=1 // pred_check_branch
      %10 = sbr.rel (0) target = $region5
    $region4: #{tpu_custom_call.1} parent=1 // pred_region
      %s12 = ssub.s32 256, 256
      %13 = vsyncadd [#allocation3], %s12
      %s14 = sshll.u32 [#allocation2], 4
      %s15 = int_to_ptr.vmem [resolvable:$true] %s14
      %20 = dma.hbm_to_vmem [thread:$0]  %s0, 256, %s15, [#allocation3], 128, 128, 8
    $region5: #{tpu_custom_call.1} parent=1 // pred_fallthru
      _
    // Predicated region
    $region6: #{tpu_custom_call.1} parent=1 // pred_check
      _
    $region7: #{tpu_custom_call.1} parent=1 // pred_check_branch
      %22 = sbr.rel (0) target = $region9
    $region8: #{tpu_custom_call.1} parent=1 // pred_region
      _
    $region9: #{tpu_custom_call.1} parent=1 // pred_fallthru
      _
    // Predicated region
    $region10: #{tpu_custom_call.1} parent=1 // pred_check
      _
    $region11: #{tpu_custom_call.1} parent=1 // pred_check_branch
      %24 = sbr.rel (0) target = $region13
    $region12: #{tpu_custom_call.1} parent=1 // pred_region
      %25 = dma.done [#allocation3], 256
    $region13: #{tpu_custom_call.1} parent=1 // pred_fallthru
      _
    %v26 = vld [vmem:[#allocation2] sm:$0xff]
    %v27 = vld [vmem:[#allocation2 + $0x8] sm:$0xff]
    %v28 = vmul.f32 %v26, %v26
    %v29 = vmul.f32 %v27, %v27
    %vm30 = vcmask 261120
    %v31 = vsel %vm30, %v28, 0.0
    %32 = vadd.xlane.f32.xlu0 %v31
    %v33 = vpop.xlane.xlu0 %32
    %v34 = vsel %vm30, %v29, 0.0
    %35 = vadd.xlane.f32.xlu0 %v34
    %v36 = vpop.xlane.xlu0 %35
    %v37 = vmul.f32 %v33, 0.03125
    %v38 = vmul.f32 %v36, 0.03125
    %v39 = vadd.f32 %v37, 1e-06
    %v40 = vadd.f32 %v38, 1e-06
    %v41 = vrsqrt.pop %v39
    %v42 = vrsqrt.pop %v40
    %v43 = vmul.f32 %v26, %v41
    %v44 = vmul.f32 %v27, %v42
    %v45 = vld [vmem:[%s1] sm:$0x1]
    %v47 = vlaneseq
    %v48 = vshrl.u32 %v47, 7
    %v49 = vsub.s32 0, %v48
    %v50 = vrot.slane %v45, %v49
    %v52 = vmul.f32 %v43, %v50
    %v53 = vmul.f32 %v44, %v50
    %54 = vst.msk [vmem:[#allocation5] sm:$0xff] %vm30, %v52
    %55 = vst.msk [vmem:[#allocation5 + $0x8] sm:$0xff] %vm30, %v53
    // Predicated region
    $region14: #{tpu_custom_call.1} parent=1 // pred_check
      _
    $region15: #{tpu_custom_call.1} parent=1 // pred_check_branch
      %57 = sbr.rel (0) target = $region17
    $region16: #{tpu_custom_call.1} parent=1 // pred_region
      %s59 = ssub.s32 256, 256
      %60 = vsyncadd [#allocation4], %s59
      %s61 = sshll.u32 [#allocation5], 4
      %s62 = int_to_ptr.vmem [resolvable:$true] %s61
      %67 = dma.vmem_to_hbm [thread:$0]  %s62, 256, %s2, [#allocation4], 128, 128, 8
    $region17: #{tpu_custom_call.1} parent=1 // pred_fallthru
      _
    // Predicated region
    $region18: #{tpu_custom_call.1} parent=1 // pred_check
      _
    $region19: #{tpu_custom_call.1} parent=1 // pred_check_branch
      %69 = sbr.rel (0) target = $region21
    $region20: #{tpu_custom_call.1} parent=1 // pred_region
      %70 = dma.done [#allocation4], 256
    $region21: #{tpu_custom_call.1} parent=1 // pred_fallthru
      _
    %71 = vsyncpa [#allocation3], 1
    %72 = vsyncpa [#allocation4], 1

</llo_original>
